<compile_context>
chip_gen: v7x
topology: tpu7x:2x2x1
jax: 0.10.0
libtpu: 0.0.40
codegen_flags: <defaults>
</compile_context>

<pallas_src>
import jax
import jax.numpy as jnp
from jax.experimental import pallas as pl
from jax.experimental.pallas import tpu as pltpu


def mlp_kernel(x_ref, w1_ref, b1_ref, w2_ref, b2_ref, w3_ref, b3_ref, o_ref):
    # Weights/biases are fully VMEM-resident (constant index_map); grid tiles batch.
    # bf16 operands -> MXU bf16 rate; f32 accumulation via preferred_element_type.
    x = x_ref[...]                                                       # (tm, n_in_p) bf16
    h1 = jnp.dot(x, w1_ref[...], preferred_element_type=jnp.float32) + b1_ref[...]
    h1 = jnp.maximum(h1, 0.0).astype(jnp.bfloat16)                       # ReLU, back to bf16
    h2 = jnp.dot(h1, w2_ref[...], preferred_element_type=jnp.float32) + b2_ref[...]
    h2 = jnp.maximum(h2, 0.0).astype(jnp.bfloat16)                       # ReLU
    z = jnp.dot(h2, w3_ref[...], preferred_element_type=jnp.float32) + b3_ref[...]
    o_ref[...] = jax.nn.sigmoid(z).astype(o_ref.dtype)                   # sigmoid, f32 out


def _round_up(n, m):
    return ((n + m - 1) // m) * m


def _pad_to(a, target_shape):
    pads = [(0, t - s) for s, t in zip(a.shape, target_shape)]
    return jnp.pad(a, pads)


def mlp_forward(x, w1, b1, w2, b2, w3, b3, *, tm=256,
                vmem_limit_bytes=48 * 1024 * 1024):
    """x: (B, n_in) f32; w_i: (in, out) f32; b_i: (1, out) f32. Returns (B, n_out) f32."""
    B, n_in = x.shape
    h = w1.shape[1]
    n_out = w3.shape[1]

    # Don't over-pad tiny batches, but keep the tile at least one MXU block tall.
    tm = max(128, min(tm, _round_up(B, 128)))

    # Lane/contraction padding to clean (8,128)-aligned, lane-dense blocks.
    n_in_p = _round_up(n_in, 128)
    h_p = _round_up(h, 128)
    n_out_p = _round_up(n_out, 128)
    B_p = _round_up(B, tm)

    cdt = jnp.bfloat16
    x_p = _pad_to(x, (B_p, n_in_p)).astype(cdt)
    w1_p = _pad_to(w1, (n_in_p, h_p)).astype(cdt)
    w2_p = _pad_to(w2, (h_p, h_p)).astype(cdt)
    w3_p = _pad_to(w3, (h_p, n_out_p)).astype(cdt)
    b1_p = _pad_to(b1, (1, h_p)).astype(jnp.float32)
    b2_p = _pad_to(b2, (1, h_p)).astype(jnp.float32)
    b3_p = _pad_to(b3, (1, n_out_p)).astype(jnp.float32)

    grid = (B_p // tm,)
    full = lambda i: (0, 0)  # weights/biases: same full block for every batch tile
    # NOTE(v7x): weights never change across grid steps; if VMEM headroom is tight,
    # pipeline_mode=pl.Buffered(1) on the six constant-index specs drops their
    # second buffer. Default double-buffering fits comfortably at these sizes.

    out = pl.pallas_call(
        mlp_kernel,
        out_shape=jax.ShapeDtypeStruct((B_p, n_out_p), jnp.float32),
        grid_spec=pltpu.PrefetchScalarGridSpec(
            num_scalar_prefetch=0,
            grid=grid,
            in_specs=[
                pl.BlockSpec((tm, n_in_p), lambda i: (i, 0)),   # x tile (bf16)
                pl.BlockSpec((n_in_p, h_p), full),              # W1 (bf16)
                pl.BlockSpec((1, h_p), full),                   # b1 (f32)
                pl.BlockSpec((h_p, h_p), full),                 # W2 (bf16)
                pl.BlockSpec((1, h_p), full),                   # b2 (f32)
                pl.BlockSpec((h_p, n_out_p), full),             # W3 (bf16)
                pl.BlockSpec((1, n_out_p), full),               # b3 (f32)
            ],
            out_specs=pl.BlockSpec((tm, n_out_p), lambda i: (i, 0)),
        ),
        compiler_params=pltpu.CompilerParams(
            dimension_semantics=("parallel",),
            vmem_limit_bytes=vmem_limit_bytes,
        ),
    )(x_p, w1_p, b1_p, w2_p, b2_p, w3_p, b3_p)

    # Strip batch and lane padding back to the module's logical output shape.
    return out[:B, :n_out]


def mlp_reference(x, w1, b1, w2, b2, w3, b3):
    h1 = jax.nn.relu(x @ w1 + b1)
    h2 = jax.nn.relu(h1 @ w2 + b2)
    return jax.nn.sigmoid(h2 @ w3 + b3)


if __name__ == "__main__":
    # Small, deliberately non-aligned shapes consistent with the module's forward
    # (Linear 6373->200, 200->200, 200->11 shrunk for the demo).
    B = 10
    N_IN = 300
    H = 200
    N_OUT = 11

    key = jax.random.PRNGKey(0)
    kx, k1, k2, k3, kb1, kb2, kb3 = jax.random.split(key, 7)

    x = jax.random.normal(kx, (B, N_IN), dtype=jnp.float32)

    def init_w(k, fan_in, fan_out):
        bound = 1.0 / jnp.sqrt(fan_in)
        return jax.random.uniform(k, (fan_in, fan_out), jnp.float32, -bound, bound)

    w1 = init_w(k1, N_IN, H)
    w2 = init_w(k2, H, H)
    w3 = init_w(k3, H, N_OUT)
    b1 = jax.random.uniform(kb1, (1, H), jnp.float32, -0.1, 0.1)
    b2 = jax.random.uniform(kb2, (1, H), jnp.float32, -0.1, 0.1)
    b3 = jax.random.uniform(kb3, (1, N_OUT), jnp.float32, -0.1, 0.1)

    out = mlp_forward(x, w1, b1, w2, b2, w3, b3)
    out = jax.block_until_ready(out)

    ref = mlp_reference(x, w1, b1, w2, b2, w3, b3)
    assert out.shape == (B, N_OUT)
    # bf16 operands with f32 accumulation: loose-but-tight-enough tolerance.
    assert jnp.allclose(out, ref, atol=2e-2, rtol=2e-2), \
        f"max abs err {jnp.max(jnp.abs(out - ref))}"

    print("KERNEL_OK")
</pallas_src>

<mosaic_0001>
module attributes {stable_mosaic.version = 11 : i64} {
  func.func @mlp_kernel(%arg0: i32, %arg1: memref<128x384xbf16, #tpu.memory_space<vmem>>, %arg2: memref<384x256xbf16, #tpu.memory_space<vmem>>, %arg3: memref<1x256xf32, #tpu.memory_space<vmem>>, %arg4: memref<256x256xbf16, #tpu.memory_space<vmem>>, %arg5: memref<1x256xf32, #tpu.memory_space<vmem>>, %arg6: memref<256x128xbf16, #tpu.memory_space<vmem>>, %arg7: memref<1x128xf32, #tpu.memory_space<vmem>>, %arg8: memref<128x128xf32, #tpu.memory_space<vmem>>) attributes {dimension_semantics = [#tpu.dimension_semantics<parallel>], iteration_bounds = array<i64: 1>, scalar_prefetch = 0 : i64, scratch_operands = 0 : i64, tpu.core_type = #tpu.core_type<tc>, window_params = [{transform_indices = @transform_0, window_bounds = array<i64: 128, 384>}, {pipeline_mode = #tpu.pipeline_mode<synchronous>, transform_indices = @transform_1, window_bounds = array<i64: 384, 256>}, {pipeline_mode = #tpu.pipeline_mode<synchronous>, transform_indices = @transform_2, window_bounds = array<i64: 1, 256>}, {pipeline_mode = #tpu.pipeline_mode<synchronous>, transform_indices = @transform_3, window_bounds = array<i64: 256, 256>}, {pipeline_mode = #tpu.pipeline_mode<synchronous>, transform_indices = @transform_4, window_bounds = array<i64: 1, 256>}, {pipeline_mode = #tpu.pipeline_mode<synchronous>, transform_indices = @transform_5, window_bounds = array<i64: 256, 128>}, {pipeline_mode = #tpu.pipeline_mode<synchronous>, transform_indices = @transform_6, window_bounds = array<i64: 1, 128>}, {transform_indices = @transform_7, window_bounds = array<i64: 128, 128>}]} {
    %c0 = arith.constant 0 : index
    %c0_0 = arith.constant 0 : index
    %0 = vector.load %arg1[%c0, %c0_0] : memref<128x384xbf16, #tpu.memory_space<vmem>>, vector<128x384xbf16>
    %c0_1 = arith.constant 0 : index
    %c0_2 = arith.constant 0 : index
    %1 = vector.load %arg2[%c0_1, %c0_2] : memref<384x256xbf16, #tpu.memory_space<vmem>>, vector<384x256xbf16>
    %cst = arith.constant dense<0.000000e+00> : vector<128x256xf32>
    %2 = tpu.matmul %0, %1, %cst {dimension_numbers = #tpu.dot_dimension_numbers<[1], [0], [0], [1], [0, 0, 1, 1], [], []>} : vector<128x384xbf16>, vector<384x256xbf16>, vector<128x256xf32> -> vector<128x256xf32>
    %c0_3 = arith.constant 0 : index
    %c0_4 = arith.constant 0 : index
    %3 = vector.load %arg3[%c0_3, %c0_4] : memref<1x256xf32, #tpu.memory_space<vmem>>, vector<1x256xf32>
    %4 = vector.broadcast %3 : vector<1x256xf32> to vector<128x256xf32>
    %5 = arith.addf %2, %4 : vector<128x256xf32>
    %cst_5 = arith.constant 0.000000e+00 : f32
    %6 = vector.broadcast %cst_5 : f32 to vector<128x256xf32>
    %7 = arith.maximumf %5, %6 : vector<128x256xf32>
    %8 = arith.truncf %7 : vector<128x256xf32> to vector<128x256xbf16>
    %c0_6 = arith.constant 0 : index
    %c0_7 = arith.constant 0 : index
    %9 = vector.load %arg4[%c0_6, %c0_7] : memref<256x256xbf16, #tpu.memory_space<vmem>>, vector<256x256xbf16>
    %cst_8 = arith.constant dense<0.000000e+00> : vector<128x256xf32>
    %10 = tpu.matmul %8, %9, %cst_8 {dimension_numbers = #tpu.dot_dimension_numbers<[1], [0], [0], [1], [0, 0, 1, 1], [], []>} : vector<128x256xbf16>, vector<256x256xbf16>, vector<128x256xf32> -> vector<128x256xf32>
    %c0_9 = arith.constant 0 : index
    %c0_10 = arith.constant 0 : index
    %11 = vector.load %arg5[%c0_9, %c0_10] : memref<1x256xf32, #tpu.memory_space<vmem>>, vector<1x256xf32>
    %12 = vector.broadcast %11 : vector<1x256xf32> to vector<128x256xf32>
    %13 = arith.addf %10, %12 : vector<128x256xf32>
    %cst_11 = arith.constant 0.000000e+00 : f32
    %14 = vector.broadcast %cst_11 : f32 to vector<128x256xf32>
    %15 = arith.maximumf %13, %14 : vector<128x256xf32>
    %16 = arith.truncf %15 : vector<128x256xf32> to vector<128x256xbf16>
    %c0_12 = arith.constant 0 : index
    %c0_13 = arith.constant 0 : index
    %17 = vector.load %arg6[%c0_12, %c0_13] : memref<256x128xbf16, #tpu.memory_space<vmem>>, vector<256x128xbf16>
    %cst_14 = arith.constant dense<0.000000e+00> : vector<128x128xf32>
    %18 = tpu.matmul %16, %17, %cst_14 {dimension_numbers = #tpu.dot_dimension_numbers<[1], [0], [0], [1], [0, 0, 1, 1], [], []>} : vector<128x256xbf16>, vector<256x128xbf16>, vector<128x128xf32> -> vector<128x128xf32>
    %c0_15 = arith.constant 0 : index
    %c0_16 = arith.constant 0 : index
    %19 = vector.load %arg7[%c0_15, %c0_16] : memref<1x128xf32, #tpu.memory_space<vmem>>, vector<1x128xf32>
    %20 = vector.broadcast %19 : vector<1x128xf32> to vector<128x128xf32>
    %21 = arith.addf %18, %20 : vector<128x128xf32>
    %22 = arith.negf %21 : vector<128x128xf32>
    %23 = math.exp %22 : vector<128x128xf32>
    %cst_17 = arith.constant 1.000000e+00 : f32
    %24 = vector.broadcast %cst_17 : f32 to vector<128x128xf32>
    %25 = arith.addf %24, %23 : vector<128x128xf32>
    %26 = arith.divf %24, %25 : vector<128x128xf32>
    %c0_18 = arith.constant 0 : index
    %c0_19 = arith.constant 0 : index
    %27 = vector.load %arg8[%c0_18, %c0_19] : memref<128x128xf32, #tpu.memory_space<vmem>>, vector<128x128xf32>
    tpu.vector_store %arg8[%c0_18, %c0_19], %26 {strides = array<i32>} : memref<128x128xf32, #tpu.memory_space<vmem>>, vector<128x128xf32>,
    return
  }
  func.func @transform_0(%arg0: i32) -> (i32, i32) {
    %c0_i32 = arith.constant 0 : i32
    %c0_i32_0 = arith.constant 0 : i32
    return %arg0, %c0_i32 : i32, i32
  }
  func.func @transform_1(%arg0: i32) -> (i32, i32) {
    %c0_i32 = arith.constant 0 : i32
    %c0_i32_0 = arith.constant 0 : i32
    %c0_i32_1 = arith.constant 0 : i32
    return %c0_i32, %c0_i32_0 : i32, i32
  }
  func.func @transform_2(%arg0: i32) -> (i32, i32) {
    %c0_i32 = arith.constant 0 : i32
    %c0_i32_0 = arith.constant 0 : i32
    %c0_i32_1 = arith.constant 0 : i32
    return %c0_i32, %c0_i32_0 : i32, i32
  }
  func.func @transform_3(%arg0: i32) -> (i32, i32) {
    %c0_i32 = arith.constant 0 : i32
    %c0_i32_0 = arith.constant 0 : i32
    %c0_i32_1 = arith.constant 0 : i32
    return %c0_i32, %c0_i32_0 : i32, i32
  }
  func.func @transform_4(%arg0: i32) -> (i32, i32) {
    %c0_i32 = arith.constant 0 : i32
    %c0_i32_0 = arith.constant 0 : i32
    %c0_i32_1 = arith.constant 0 : i32
    return %c0_i32, %c0_i32_0 : i32, i32
  }
  func.func @transform_5(%arg0: i32) -> (i32, i32) {
    %c0_i32 = arith.constant 0 : i32
    %c0_i32_0 = arith.constant 0 : i32
    %c0_i32_1 = arith.constant 0 : i32
    return %c0_i32, %c0_i32_0 : i32, i32
  }
  func.func @transform_6(%arg0: i32) -> (i32, i32) {
    %c0_i32 = arith.constant 0 : i32
    %c0_i32_0 = arith.constant 0 : i32
    %c0_i32_1 = arith.constant 0 : i32
    return %c0_i32, %c0_i32_0 : i32, i32
  }
  func.func @transform_7(%arg0: i32) -> (i32, i32) {
    %c0_i32 = arith.constant 0 : i32
    %c0_i32_0 = arith.constant 0 : i32
    return %arg0, %c0_i32 : i32, i32
  }
}

</mosaic_0001>

<llo_original>
// kernel: tpu_custom_call.1
$region0: #{tpu_custom_call.1}
  #allocation0 [shape = 'u32[]', space=smem, size = 0x4, offset = 0x4, fixed_abs, tag = 'smem constant byte address 0x4 - core index']
  #allocation1 [shape = 'u32[144,128]{1,0:T(1,128)}', space=vmem, size = 0x12000, scoped, tag = 'internal scratch']
  %s0 = inlined_call_operand.hbm [shape: bf16[128,384], index: 0, kind: input, shape index: {}]
  %s1 = inlined_call_operand.hbm [shape: bf16[384,256], index: 1, kind: input, shape index: {}]
  %s2 = inlined_call_operand.vmem [shape: f32[1,256], index: 2, kind: input, shape index: {}]
  %s3 = inlined_call_operand.hbm [shape: bf16[256,256], index: 3, kind: input, shape index: {}]
  %s4 = inlined_call_operand.vmem [shape: f32[1,256], index: 4, kind: input, shape index: {}]
  %s5 = inlined_call_operand.hbm [shape: bf16[256,128], index: 5, kind: input, shape index: {}]
  %s6 = inlined_call_operand.vmem [shape: f32[1,128], index: 6, kind: input, shape index: {}]
  %s7 = inlined_call_operand.hbm [shape: f32[128,128], index: 7, kind: output, shape index: {}]
  %s8 = sld [smem:[#allocation0]]
  $region54: #{tpu_custom_call.1} parent=0
    _
  %s10 = ssub.s32 1, %s8
  %s11 = scalar_select 0, %s10, %s8
  $region1: #{tpu_custom_call.1} parent=0
    #allocation2 [shape = 'u8[98304]{0}', space=vmem, size = 0x18000, scoped, tag = 'input window, operand 0, single buffered']
    #allocation3 [shape = 's32[1]{0}', space=sflag, size = 0x4, scoped, tag = 'scoped memory for tpu_custom_call.1']
    #allocation4 [shape = 's32[1]{0}', space=sflag, size = 0x4, scoped, tag = 'scoped memory for tpu_custom_call.1']
    #allocation5 [shape = 'u8[196608]{0}', space=vmem, size = 0x30000, scoped, tag = 'input window, operand 1, single buffered']
    #allocation6 [shape = 's32[1]{0}', space=sflag, size = 0x4, scoped, tag = 'scoped memory for tpu_custom_call.1']
    #allocation7 [shape = 'u8[131072]{0}', space=vmem, size = 0x20000, scoped, tag = 'input window, operand 3, single buffered']
    #allocation8 [shape = 'u8[65536]{0}', space=vmem, size = 0x10000, scoped, tag = 'input window, operand 5, single buffered']
    #allocation9 [shape = 's32[1]{0}', space=sflag, size = 0x4, scoped, tag = 'scoped memory for tpu_custom_call.1']
    #allocation10 [shape = 'u8[65536]{0}', space=vmem, size = 0x10000, scoped, tag = 'output window, operand 0, single buffered']
    %12 = vsyncpa [#allocation3], 0
    %13 = vsyncpa [#allocation6], 0
    %14 = vsyncpa [#allocation9], 0
    %15 = vsyncpa [#allocation4], 0
    // Predicated region
    $region2: #{tpu_custom_call.1} parent=1 // pred_check
      _
    $region3: #{tpu_custom_call.1} parent=1 // pred_check_branch
      %17 = sbr.rel (0) target = $region5
    $region4: #{tpu_custom_call.1} parent=1 // pred_region
      %s19 = ssub.s32 3072, 3072
      %20 = vsyncadd [#allocation3], %s19
      %s21 = sshll.u32 [#allocation2], 4
      %s22 = int_to_ptr.vmem [resolvable:$true] %s21
      %27 = dma.hbm_to_vmem [thread:$0]  %s0, 3072, %s22, [#allocation3], 192, 192, 12
    $region5: #{tpu_custom_call.1} parent=1 // pred_fallthru
      _
    // Predicated region
    $region6: #{tpu_custom_call.1} parent=1 // pred_check
      _
    $region7: #{tpu_custom_call.1} parent=1 // pred_check_branch
      %29 = sbr.rel (0) target = $region9
    $region8: #{tpu_custom_call.1} parent=1 // pred_region
      %s31 = ssub.s32 6144, 6144
      %32 = vsyncadd [#allocation6], %s31
      %s33 = sshll.u32 [#allocation5], 4
      %s34 = int_to_ptr.vmem [resolvable:$true] %s33
      %39 = dma.hbm_to_vmem [thread:$0]  %s1, 6144, %s34, [#allocation6], 128, 128, 8
    $region9: #{tpu_custom_call.1} parent=1 // pred_fallthru
      _
    // Predicated region
    $region10: #{tpu_custom_call.1} parent=1 // pred_check
      _
    $region11: #{tpu_custom_call.1} parent=1 // pred_check_branch
      %41 = sbr.rel (0) target = $region13
    $region12: #{tpu_custom_call.1} parent=1 // pred_region
      _
    $region13: #{tpu_custom_call.1} parent=1 // pred_fallthru
      _
    // Predicated region
    $region14: #{tpu_custom_call.1} parent=1 // pred_check
      _
    $region15: #{tpu_custom_call.1} parent=1 // pred_check_branch
      %43 = sbr.rel (0) target = $region17
    $region16: #{tpu_custom_call.1} parent=1 // pred_region
      %s45 = ssub.s32 4096, 4096
      %46 = vsyncadd [#allocation6], %s45
      %s47 = sshll.u32 [#allocation7], 4
      %s48 = int_to_ptr.vmem [resolvable:$true] %s47
      %53 = dma.hbm_to_vmem [thread:$0]  %s3, 4096, %s48, [#allocation6], 128, 128, 8
    $region17: #{tpu_custom_call.1} parent=1 // pred_fallthru
      _
    // Predicated region
    $region18: #{tpu_custom_call.1} parent=1 // pred_check
      _
    $region19: #{tpu_custom_call.1} parent=1 // pred_check_branch
      %55 = sbr.rel (0) target = $region21
    $region20: #{tpu_custom_call.1} parent=1 // pred_region
      _
    $region21: #{tpu_custom_call.1} parent=1 // pred_fallthru
      _
    // Predicated region
    $region22: #{tpu_custom_call.1} parent=1 // pred_check
      _
    $region23: #{tpu_custom_call.1} parent=1 // pred_check_branch
      %57 = sbr.rel (0) target = $region25
    $region24: #{tpu_custom_call.1} parent=1 // pred_region
      %s59 = ssub.s32 2048, 2048
      %60 = vsyncadd [#allocation9], %s59
      %s61 = sshll.u32 [#allocation8], 4
      %s62 = int_to_ptr.vmem [resolvable:$true] %s61
      %67 = dma.hbm_to_vmem [thread:$0]  %s5, 2048, %s62, [#allocation9], 64, 64, 4
    $region25: #{tpu_custom_call.1} parent=1 // pred_fallthru
      _
    // Predicated region
    $region26: #{tpu_custom_call.1} parent=1 // pred_check
      _
    $region27: #{tpu_custom_call.1} parent=1 // pred_check_branch
      %69 = sbr.rel (0) target = $region29
    $region28: #{tpu_custom_call.1} parent=1 // pred_region
      _
    $region29: #{tpu_custom_call.1} parent=1 // pred_fallthru
      _
    // Predicated region
    $region30: #{tpu_custom_call.1} parent=1 // pred_check
      _
    $region31: #{tpu_custom_call.1} parent=1 // pred_check_branch
      %71 = sbr.rel (0) target = $region33
    $region32: #{tpu_custom_call.1} parent=1 // pred_region
      %72 = dma.done [#allocation3], 3072
    $region33: #{tpu_custom_call.1} parent=1 // pred_fallthru
      _
    // Predicated region
    $region34: #{tpu_custom_call.1} parent=1 // pred_check
      _
    $region35: #{tpu_custom_call.1} parent=1 // pred_check_branch
      %74 = sbr.rel (0) target = $region37
    $region36: #{tpu_custom_call.1} parent=1 // pred_region
      %75 = dma.done [#allocation6], 6144
    $region37: #{tpu_custom_call.1} parent=1 // pred_fallthru
      _
    // Predicated region
    $region38: #{tpu_custom_call.1} parent=1 // pred_check
      _
    $region39: #{tpu_custom_call.1} parent=1 // pred_check_branch
      %77 = sbr.rel (0) target = $region41
    $region40: #{tpu_custom_call.1} parent=1 // pred_region
      %78 = dma.done [#allocation6], 4096
    $region41: #{tpu_custom_call.1} parent=1 // pred_fallthru
      _
    // Predicated region
    $region42: #{tpu_custom_call.1} parent=1 // pred_check
      _
    $region43: #{tpu_custom_call.1} parent=1 // pred_check_branch
      %80 = sbr.rel (0) target = $region45
    $region44: #{tpu_custom_call.1} parent=1 // pred_region
      %81 = dma.done [#allocation9], 2048
    $region45: #{tpu_custom_call.1} parent=1 // pred_fallthru
      _
    %v83 = vld [vmem:[#allocation2] sm:$0xff]
    %v84 = vld [vmem:[#allocation2 + $0x8] sm:$0xf]
    %v85 = vld [vmem:[#allocation2 + $0xc] sm:$0xff]
    %v86 = vld [vmem:[#allocation2 + $0x14] sm:$0xf]
    %v87 = vld [vmem:[#allocation2 + $0x18] sm:$0xff]
    %v88 = vld [vmem:[#allocation2 + $0x20] sm:$0xf]
    %v89 = vld [vmem:[#allocation2 + $0x24] sm:$0xff]
    %v90 = vld [vmem:[#allocation2 + $0x2c] sm:$0xf]
    %v91 = vld [vmem:[#allocation2 + $0x30] sm:$0xff]
    %v92 = vld [vmem:[#allocation2 + $0x38] sm:$0xf]
    %v93 = vld [vmem:[#allocation2 + $0x3c] sm:$0xff]
    %v94 = vld [vmem:[#allocation2 + $0x44] sm:$0xf]
    %v95 = vld [vmem:[#allocation2 + $0x48] sm:$0xff]
    %v96 = vld [vmem:[#allocation2 + $0x50] sm:$0xf]
    %v97 = vld [vmem:[#allocation2 + $0x54] sm:$0xff]
    %v98 = vld [vmem:[#allocation2 + $0x5c] sm:$0xf]
    %v99 = vld [vmem:[#allocation2 + $0x60] sm:$0xff]
    %v100 = vld [vmem:[#allocation2 + $0x68] sm:$0xf]
    %v101 = vld [vmem:[#allocation2 + $0x6c] sm:$0xff]
    %v102 = vld [vmem:[#allocation2 + $0x74] sm:$0xf]
    %v103 = vld [vmem:[#allocation2 + $0x78] sm:$0xff]
    %v104 = vld [vmem:[#allocation2 + $0x80] sm:$0xf]
    %v105 = vld [vmem:[#allocation2 + $0x84] sm:$0xff]
    %v106 = vld [vmem:[#allocation2 + $0x8c] sm:$0xf]
    %v107 = vld [vmem:[#allocation2 + $0x90] sm:$0xff]
    %v108 = vld [vmem:[#allocation2 + $0x98] sm:$0xf]
    %v109 = vld [vmem:[#allocation2 + $0x9c] sm:$0xff]
    %v110 = vld [vmem:[#allocation2 + $0xa4] sm:$0xf]
    %v111 = vld [vmem:[#allocation2 + $0xa8] sm:$0xff]
    %v112 = vld [vmem:[#allocation2 + $0xb0] sm:$0xf]
    %v113 = vld [vmem:[#allocation2 + $0xb4] sm:$0xff]
    %v114 = vld [vmem:[#allocation2 + $0xbc] sm:$0xf]
    %v115 = vld [vmem:[#allocation5] sm:$0xff]
    %v116 = vld [vmem:[#allocation5 + $0x8] sm:$0xff]
    %v117 = vld [vmem:[#allocation5 + $0x10] sm:$0xff]
    %v118 = vld [vmem:[#allocation5 + $0x18] sm:$0xff]
    %v119 = vld [vmem:[#allocation5 + $0x20] sm:$0xff]
    %v120 = vld [vmem:[#allocation5 + $0x28] sm:$0xff]
    %v121 = vld [vmem:[#allocation5 + $0x30] sm:$0xff]
    %v122 = vld [vmem:[#allocation5 + $0x38] sm:$0xff]
    %v123 = vld [vmem:[#allocation5 + $0x40] sm:$0xff]
    %v124 = vld [vmem:[#allocation5 + $0x48] sm:$0xff]
    %v125 = vld [vmem:[#allocation5 + $0x50] sm:$0xff]
    %v126 = vld [vmem:[#allocation5 + $0x58] sm:$0xff]
    %v127 = vld [vmem:[#allocation5 + $0x60] sm:$0xff]
    %v128 = vld [vmem:[#allocation5 + $0x68] sm:$0xff]
    %v129 = vld [vmem:[#allocation5 + $0x70] sm:$0xff]
    %v130 = vld [vmem:[#allocation5 + $0x78] sm:$0xff]
    %v131 = vld [vmem:[#allocation5 + $0x80] sm:$0xff]
    %v132 = vld [vmem:[#allocation5 + $0x88] sm:$0xff]
    %v133 = vld [vmem:[#allocation5 + $0x90] sm:$0xff]
    %v134 = vld [vmem:[#allocation5 + $0x98] sm:$0xff]
    %v135 = vld [vmem:[#allocation5 + $0xa0] sm:$0xff]
    %v136 = vld [vmem:[#allocation5 + $0xa8] sm:$0xff]
    %v137 = vld [vmem:[#allocation5 + $0xb0] sm:$0xff]
    %v138 = vld [vmem:[#allocation5 + $0xb8] sm:$0xff]
    %v139 = vld [vmem:[#allocation5 + $0xc0] sm:$0xff]
    %v140 = vld [vmem:[#allocation5 + $0xc8] sm:$0xff]
    %v141 = vld [vmem:[#allocation5 + $0xd0] sm:$0xff]
    %v142 = vld [vmem:[#allocation5 + $0xd8] sm:$0xff]
    %v143 = vld [vmem:[#allocation5 + $0xe0] sm:$0xff]
    %v144 = vld [vmem:[#allocation5 + $0xe8] sm:$0xff]
    %v145 = vld [vmem:[#allocation5 + $0xf0] sm:$0xff]
    %v146 = vld [vmem:[#allocation5 + $0xf8] sm:$0xff]
    %v147 = vld [vmem:[#allocation5 + $0x100] sm:$0xff]
    %v148 = vld [vmem:[#allocation5 + $0x108] sm:$0xff]
    %v149 = vld [vmem:[#allocation5 + $0x110] sm:$0xff]
    %v150 = vld [vmem:[#allocation5 + $0x118] sm:$0xff]
    %v151 = vld [vmem:[#allocation5 + $0x120] sm:$0xff]
    %v152 = vld [vmem:[#allocation5 + $0x128] sm:$0xff]
    %v153 = vld [vmem:[#allocation5 + $0x130] sm:$0xff]
    %v154 = vld [vmem:[#allocation5 + $0x138] sm:$0xff]
    %v155 = vld [vmem:[#allocation5 + $0x140] sm:$0xff]
    %v156 = vld [vmem:[#allocation5 + $0x148] sm:$0xff]
    %v157 = vld [vmem:[#allocation5 + $0x150] sm:$0xff]
    %v158 = vld [vmem:[#allocation5 + $0x158] sm:$0xff]
    %v159 = vld [vmem:[#allocation5 + $0x160] sm:$0xff]
    %v160 = vld [vmem:[#allocation5 + $0x168] sm:$0xff]
    %v161 = vld [vmem:[#allocation5 + $0x170] sm:$0xff]
    %v162 = vld [vmem:[#allocation5 + $0x178] sm:$0xff]
    %v163 = vld [vmem:[%s2] sm:$0x3]
    %v165 = vlaneseq
    %v166 = vshrl.u32 %v165, 7
    %v167 = vsub.s32 0, %v166
    %v168 = vrot.slane %v163, %v167
    %v169 = vlaneseq
    %v170 = vshrl.u32 %v169, 7
    %v171 = vsub.s32 1, %v170
    %v172 = vrot.slane %v163, %v171
    %v207 = vunpack.c.l.b16 %v83
    %v208 = vunpack.c.h.b16 %v83
    %v209 = vunpack.c.l.b16 %v84
    %v210 = vunpack.c.l.b16 %v85
    %v211 = vunpack.c.h.b16 %v85
    %v212 = vunpack.c.l.b16 %v86
    %v213 = vunpack.c.l.b16 %v87
    %v214 = vunpack.c.h.b16 %v87
    %v215 = vunpack.c.l.b16 %v88
    %v216 = vunpack.c.l.b16 %v89
    %v217 = vunpack.c.h.b16 %v89
    %v218 = vunpack.c.l.b16 %v90
    %v219 = vunpack.c.l.b16 %v91
    %v220 = vunpack.c.h.b16 %v91
    %v221 = vunpack.c.l.b16 %v92
    %v222 = vunpack.c.l.b16 %v93
    %v223 = vunpack.c.h.b16 %v93
    %v224 = vunpack.c.l.b16 %v94
    %v225 = vunpack.c.l.b16 %v95
    %v226 = vunpack.c.h.b16 %v95
    %v227 = vunpack.c.l.b16 %v96
    %v228 = vunpack.c.l.b16 %v97
    %v229 = vunpack.c.h.b16 %v97
    %v230 = vunpack.c.l.b16 %v98
    %v231 = vunpack.c.l.b16 %v99
    %v232 = vunpack.c.h.b16 %v99
    %v233 = vunpack.c.l.b16 %v100
    %v234 = vunpack.c.l.b16 %v101
    %v235 = vunpack.c.h.b16 %v101
    %v236 = vunpack.c.l.b16 %v102
    %v237 = vunpack.c.l.b16 %v103
    %v238 = vunpack.c.h.b16 %v103
    %v239 = vunpack.c.l.b16 %v104
    %v240 = vunpack.c.l.b16 %v105
    %v241 = vunpack.c.h.b16 %v105
    %v242 = vunpack.c.l.b16 %v106
    %v243 = vunpack.c.l.b16 %v107
    %v244 = vunpack.c.h.b16 %v107
    %v245 = vunpack.c.l.b16 %v108
    %v246 = vunpack.c.l.b16 %v109
    %v247 = vunpack.c.h.b16 %v109
    %v248 = vunpack.c.l.b16 %v110
    %v249 = vunpack.c.l.b16 %v111
    %v250 = vunpack.c.h.b16 %v111
    %v251 = vunpack.c.l.b16 %v112
    %v252 = vunpack.c.l.b16 %v113
    %v253 = vunpack.c.h.b16 %v113
    %v254 = vunpack.c.l.b16 %v114
    %v255 = vpack.c.b16 %v210, %v207
    %v256 = vpack.c.b16 %v211, %v208
    %v257 = vpack.c.b16 %v212, %v209
    %v258 = vpack.c.b16 %v216, %v213
    %v259 = vpack.c.b16 %v217, %v214
    %v260 = vpack.c.b16 %v218, %v215
    %v261 = vpack.c.b16 %v222, %v219
    %v262 = vpack.c.b16 %v223, %v220
    %v263 = vpack.c.b16 %v224, %v221
    %v264 = vpack.c.b16 %v228, %v225
    %v265 = vpack.c.b16 %v229, %v226
    %v266 = vpack.c.b16 %v230, %v227
    %v267 = vpack.c.b16 %v234, %v231
    %v268 = vpack.c.b16 %v235, %v232
    %v269 = vpack.c.b16 %v236, %v233
    %v270 = vpack.c.b16 %v240, %v237
    %v271 = vpack.c.b16 %v241, %v238
    %v272 = vpack.c.b16 %v242, %v239
    %v273 = vpack.c.b16 %v246, %v243
    %v274 = vpack.c.b16 %v247, %v244
    %v275 = vpack.c.b16 %v248, %v245
    %v276 = vpack.c.b16 %v252, %v249
    %v277 = vpack.c.b16 %v253, %v250
    %v278 = vpack.c.b16 %v254, %v251
    %v351 = vunpack.c.l.b16 %v115
    %v352 = vunpack.c.h.b16 %v115
    %v353 = vunpack.c.l.b16 %v116
    %v354 = vunpack.c.h.b16 %v116
    %v355 = vunpack.c.l.b16 %v117
    %v356 = vunpack.c.h.b16 %v117
    %v357 = vunpack.c.l.b16 %v118
    %v358 = vunpack.c.h.b16 %v118
    %v359 = vunpack.c.l.b16 %v119
    %v360 = vunpack.c.h.b16 %v119
    %v361 = vunpack.c.l.b16 %v120
    %v362 = vunpack.c.h.b16 %v120
    %v363 = vunpack.c.l.b16 %v121
    %v364 = vunpack.c.h.b16 %v121
    %v365 = vunpack.c.l.b16 %v122
    %v366 = vunpack.c.h.b16 %v122
    %v367 = vunpack.c.l.b16 %v123
    %v368 = vunpack.c.h.b16 %v123
    %v369 = vunpack.c.l.b16 %v124
    %v370 = vunpack.c.h.b16 %v124
    %v371 = vunpack.c.l.b16 %v125
    %v372 = vunpack.c.h.b16 %v125
    %v373 = vunpack.c.l.b16 %v126
    %v374 = vunpack.c.h.b16 %v126
    %v375 = vunpack.c.l.b16 %v127
    %v376 = vunpack.c.h.b16 %v127
    %v377 = vunpack.c.l.b16 %v128
    %v378 = vunpack.c.h.b16 %v128
    %v379 = vunpack.c.l.b16 %v129
    %v380 = vunpack.c.h.b16 %v129
    %v381 = vunpack.c.l.b16 %v130
    %v382 = vunpack.c.h.b16 %v130
    %v383 = vunpack.c.l.b16 %v131
    %v384 = vunpack.c.h.b16 %v131
    %v385 = vunpack.c.l.b16 %v132
    %v386 = vunpack.c.h.b16 %v132
    %v387 = vunpack.c.l.b16 %v133
    %v388 = vunpack.c.h.b16 %v133
    %v389 = vunpack.c.l.b16 %v134
    %v390 = vunpack.c.h.b16 %v134
    %v391 = vunpack.c.l.b16 %v135
    %v392 = vunpack.c.h.b16 %v135
    %v393 = vunpack.c.l.b16 %v136
    %v394 = vunpack.c.h.b16 %v136
    %v395 = vunpack.c.l.b16 %v137
    %v396 = vunpack.c.h.b16 %v137
    %v397 = vunpack.c.l.b16 %v138
    %v398 = vunpack.c.h.b16 %v138
    %v399 = vunpack.c.l.b16 %v139
    %v400 = vunpack.c.h.b16 %v139
    %v401 = vunpack.c.l.b16 %v140
    %v402 = vunpack.c.h.b16 %v140
    %v403 = vunpack.c.l.b16 %v141
    %v404 = vunpack.c.h.b16 %v141
    %v405 = vunpack.c.l.b16 %v142
    %v406 = vunpack.c.h.b16 %v142
    %v407 = vunpack.c.l.b16 %v143
    %v408 = vunpack.c.h.b16 %v143
    %v409 = vunpack.c.l.b16 %v144
    %v410 = vunpack.c.h.b16 %v144
    %v411 = vunpack.c.l.b16 %v145
    %v412 = vunpack.c.h.b16 %v145
    %v413 = vunpack.c.l.b16 %v146
    %v414 = vunpack.c.h.b16 %v146
    %v415 = vunpack.c.l.b16 %v147
    %v416 = vunpack.c.h.b16 %v147
    %v417 = vunpack.c.l.b16 %v148
    %v418 = vunpack.c.h.b16 %v148
    %v419 = vunpack.c.l.b16 %v149
    %v420 = vunpack.c.h.b16 %v149
    %v421 = vunpack.c.l.b16 %v150
    %v422 = vunpack.c.h.b16 %v150
    %v423 = vunpack.c.l.b16 %v151
    %v424 = vunpack.c.h.b16 %v151
    %v425 = vunpack.c.l.b16 %v152
    %v426 = vunpack.c.h.b16 %v152
    %v427 = vunpack.c.l.b16 %v153
    %v428 = vunpack.c.h.b16 %v153
    %v429 = vunpack.c.l.b16 %v154
    %v430 = vunpack.c.h.b16 %v154
    %v431 = vunpack.c.l.b16 %v155
    %v432 = vunpack.c.h.b16 %v155
    %v433 = vunpack.c.l.b16 %v156
    %v434 = vunpack.c.h.b16 %v156
    %v435 = vunpack.c.l.b16 %v157
    %v436 = vunpack.c.h.b16 %v157
    %v437 = vunpack.c.l.b16 %v158
    %v438 = vunpack.c.h.b16 %v158
    %v439 = vunpack.c.l.b16 %v159
    %v440 = vunpack.c.h.b16 %v159
    %v441 = vunpack.c.l.b16 %v160
    %v442 = vunpack.c.h.b16 %v160
    %v443 = vunpack.c.l.b16 %v161
    %v444 = vunpack.c.h.b16 %v161
    %v445 = vunpack.c.l.b16 %v162
    %v446 = vunpack.c.h.b16 %v162
    %v447 = vpack.c.b16 %v353, %v351
    %v448 = vpack.c.b16 %v354, %v352
    %v449 = vpack.c.b16 %v357, %v355
    %v450 = vpack.c.b16 %v358, %v356
    %v451 = vpack.c.b16 %v361, %v359
    %v452 = vpack.c.b16 %v362, %v360
    %v453 = vpack.c.b16 %v365, %v363
    %v454 = vpack.c.b16 %v366, %v364
    %v455 = vpack.c.b16 %v369, %v367
    %v456 = vpack.c.b16 %v370, %v368
    %v457 = vpack.c.b16 %v373, %v371
    %v458 = vpack.c.b16 %v374, %v372
    %v459 = vpack.c.b16 %v377, %v375
    %v460 = vpack.c.b16 %v378, %v376
    %v461 = vpack.c.b16 %v381, %v379
    %v462 = vpack.c.b16 %v382, %v380
    %v463 = vpack.c.b16 %v385, %v383
    %v464 = vpack.c.b16 %v386, %v384
    %v465 = vpack.c.b16 %v389, %v387
    %v466 = vpack.c.b16 %v390, %v388
    %v467 = vpack.c.b16 %v393, %v391
    %v468 = vpack.c.b16 %v394, %v392
    %v469 = vpack.c.b16 %v397, %v395
    %v470 = vpack.c.b16 %v398, %v396
    %v471 = vpack.c.b16 %v401, %v399
    %v472 = vpack.c.b16 %v402, %v400
    %v473 = vpack.c.b16 %v405, %v403
    %v474 = vpack.c.b16 %v406, %v404
    %v475 = vpack.c.b16 %v409, %v407
    %v476 = vpack.c.b16 %v410, %v408
    %v477 = vpack.c.b16 %v413, %v411
    %v478 = vpack.c.b16 %v414, %v412
    %v479 = vpack.c.b16 %v417, %v415
    %v480 = vpack.c.b16 %v418, %v416
    %v481 = vpack.c.b16 %v421, %v419
    %v482 = vpack.c.b16 %v422, %v420
    %v483 = vpack.c.b16 %v425, %v423
    %v484 = vpack.c.b16 %v426, %v424
    %v485 = vpack.c.b16 %v429, %v427
    %v486 = vpack.c.b16 %v430, %v428
    %v487 = vpack.c.b16 %v433, %v431
    %v488 = vpack.c.b16 %v434, %v432
    %v489 = vpack.c.b16 %v437, %v435
    %v490 = vpack.c.b16 %v438, %v436
    %v491 = vpack.c.b16 %v441, %v439
    %v492 = vpack.c.b16 %v442, %v440
    %v493 = vpack.c.b16 %v445, %v443
    %v494 = vpack.c.b16 %v446, %v444
    %543 = vmatprep.subr.bf16.mxu0 %v448
    %544 = vmatpush1.bf16.msra.mxu0 %v447
    %545 = vmatprep.subr.bf16.mxu0 %v450
    %546 = vmatpush1.bf16.msra.mxu0 %v449
    %547 = vmatprep.subr.bf16.mxu0 %v452
    %548 = vmatpush1.bf16.msra.mxu0 %v451
    %549 = vmatprep.subr.bf16.mxu0 %v454
    %550 = vmatpush1.bf16.msra.mxu0 %v453
    %551 = vmatprep.subr.bf16.mxu0 %v456
    %552 = vmatpush1.bf16.msra.mxu0 %v455
    %553 = vmatprep.subr.bf16.mxu0 %v458
    %554 = vmatpush1.bf16.msra.mxu0 %v457
    %555 = vmatprep.subr.bf16.mxu0 %v460
    %556 = vmatpush1.bf16.msra.mxu0 %v459
    %557 = vmatprep.subr.bf16.mxu0 %v462
    %558 = vmatpush1.bf16.msra.mxu0 %v461
    %559 = vmatprep.subr.bf16.mxu0 %v464
    %560 = vmatpush1.bf16.msra.mxu0 %v463
    %561 = vmatprep.subr.bf16.mxu0 %v466
    %562 = vmatpush1.bf16.msra.mxu0 %v465
    %563 = vmatprep.subr.bf16.mxu0 %v468
    %564 = vmatpush1.bf16.msra.mxu0 %v467
    %565 = vmatprep.subr.bf16.mxu0 %v470
    %566 = vmatpush1.bf16.msra.mxu0 %v469
    %567 = vmatprep.subr.bf16.mxu0 %v472
    %568 = vmatpush1.bf16.msra.mxu0 %v471
    %569 = vmatprep.subr.bf16.mxu0 %v474
    %570 = vmatpush1.bf16.msra.mxu0 %v473
    %571 = vmatprep.subr.bf16.mxu0 %v476
    %572 = vmatpush1.bf16.msra.mxu0 %v475
    %573 = vmatprep.subr.bf16.mxu0 %v478
    %574 = vmatpush1.bf16.msra.mxu0 %v477
    %575 = vmatprep.mubr.bf16.mxu0 %v256
    %576 = vmatmul.mubr.bf16.gmra.mrb[0].mxu0 %v255
    %v577 = vpop.f32.mrb[0].mxu0
    %v578 = vadd.f32 %v168, %v577
    %v579 = vpop.f32.mrb[0].mxu0
    %v580 = vadd.f32 %v172, %v579
    %v581 = vpop.f32.mrb[0].mxu0
    %v582 = vadd.f32 %v168, %v581
    %v583 = vpop.f32.mrb[0].mxu0
    %v584 = vadd.f32 %v172, %v583
    %585 = vmatprep.mubr.bf16.mxu0 %v259
    %586 = vmatmul.mubr.bf16.gmra.mrb[0].mxu0 %v258
    %v587 = vpop.f32.mrb[0].mxu0
    %v588 = vadd.f32 %v168, %v587
    %v589 = vpop.f32.mrb[0].mxu0
    %v590 = vadd.f32 %v172, %v589
    %v591 = vpop.f32.mrb[0].mxu0
    %v592 = vadd.f32 %v168, %v591
    %v593 = vpop.f32.mrb[0].mxu0
    %v594 = vadd.f32 %v172, %v593
    %595 = vmatprep.mubr.bf16.mxu0 %v262
    %596 = vmatmul.mubr.bf16.gmra.mrb[0].mxu0 %v261
    %v597 = vpop.f32.mrb[0].mxu0
    %v598 = vadd.f32 %v168, %v597
    %v599 = vpop.f32.mrb[0].mxu0
    %v600 = vadd.f32 %v172, %v599
    %v601 = vpop.f32.mrb[0].mxu0
    %v602 = vadd.f32 %v168, %v601
    %v603 = vpop.f32.mrb[0].mxu0
    %v604 = vadd.f32 %v172, %v603
    %605 = vmatprep.mubr.bf16.mxu0 %v265
    %606 = vmatmul.mubr.bf16.gmra.mrb[0].mxu0 %v264
    %v607 = vpop.f32.mrb[0].mxu0
    %v608 = vadd.f32 %v168, %v607
    %v609 = vpop.f32.mrb[0].mxu0
    %v610 = vadd.f32 %v172, %v609
    %v611 = vpop.f32.mrb[0].mxu0
    %v612 = vadd.f32 %v168, %v611
    %v613 = vpop.f32.mrb[0].mxu0
    %v614 = vadd.f32 %v172, %v613
    %615 = vmatprep.mubr.bf16.mxu0 %v268
    %616 = vmatmul.mubr.bf16.gmra.mrb[0].mxu0 %v267
    %v617 = vpop.f32.mrb[0].mxu0
    %v618 = vadd.f32 %v168, %v617
    %v619 = vpop.f32.mrb[0].mxu0
    %v620 = vadd.f32 %v172, %v619
    %v621 = vpop.f32.mrb[0].mxu0
    %v622 = vadd.f32 %v168, %v621
    %v623 = vpop.f32.mrb[0].mxu0
    %v624 = vadd.f32 %v172, %v623
    %625 = vmatprep.mubr.bf16.mxu0 %v271
    %626 = vmatmul.mubr.bf16.gmra.mrb[0].mxu0 %v270
    %v627 = vpop.f32.mrb[0].mxu0
    %v628 = vadd.f32 %v168, %v627
    %v629 = vpop.f32.mrb[0].mxu0
    %v630 = vadd.f32 %v172, %v629
    %v631 = vpop.f32.mrb[0].mxu0
    %v632 = vadd.f32 %v168, %v631
    %v633 = vpop.f32.mrb[0].mxu0
    %v634 = vadd.f32 %v172, %v633
    %635 = vmatprep.mubr.bf16.mxu0 %v274
    %636 = vmatmul.mubr.bf16.gmra.mrb[0].mxu0 %v273
    %v637 = vpop.f32.mrb[0].mxu0
    %v638 = vadd.f32 %v168, %v637
    %v639 = vpop.f32.mrb[0].mxu0
    %v640 = vadd.f32 %v172, %v639
    %v641 = vpop.f32.mrb[0].mxu0
    %v642 = vadd.f32 %v168, %v641
    %v643 = vpop.f32.mrb[0].mxu0
    %v644 = vadd.f32 %v172, %v643
    %645 = vmatprep.mubr.bf16.mxu0 %v277
    %646 = vmatmul.mubr.bf16.gmra.mrb[0].mxu0 %v276
    %v647 = vpop.f32.mrb[0].mxu0
    %v648 = vadd.f32 %v168, %v647
    %v649 = vpop.f32.mrb[0].mxu0
    %v650 = vadd.f32 %v172, %v649
    %v651 = vpop.f32.mrb[0].mxu0
    %v652 = vadd.f32 %v168, %v651
    %v653 = vpop.f32.mrb[0].mxu0
    %v654 = vadd.f32 %v172, %v653
    %655 = vdwg.mxu0
    %656 = vmatprep.subr.bf16.mxu0 %v480
    %657 = vmatpush1.bf16.msra.mxu0 %v479
    %658 = vmatprep.subr.bf16.mxu0 %v482
    %659 = vmatpush1.bf16.msra.mxu0 %v481
    %660 = vmatprep.subr.bf16.mxu0 %v484
    %661 = vmatpush1.bf16.msra.mxu0 %v483
    %662 = vmatprep.subr.bf16.mxu0 %v486
    %663 = vmatpush1.bf16.msra.mxu0 %v485
    %664 = vmatprep.subr.bf16.mxu0 %v488
    %665 = vmatpush1.bf16.msra.mxu0 %v487
    %666 = vmatprep.subr.bf16.mxu0 %v490
    %667 = vmatpush1.bf16.msra.mxu0 %v489
    %668 = vmatprep.subr.bf16.mxu0 %v492
    %669 = vmatpush1.bf16.msra.mxu0 %v491
    %670 = vmatprep.subr.bf16.mxu0 %v494
    %671 = vmatpush1.bf16.msra.mxu0 %v493
    %672 = vmatprep.subr.bf16.mxu0 0
    %673 = vmatpush1.bf16.msra.mxu0 0
    %674 = vmatprep.subr.bf16.mxu0 0
    %675 = vmatpush1.bf16.msra.mxu0 0
    %676 = vmatprep.subr.bf16.mxu0 0
    %677 = vmatpush1.bf16.msra.mxu0 0
    %678 = vmatprep.subr.bf16.mxu0 0
    %679 = vmatpush1.bf16.msra.mxu0 0
    %680 = vmatprep.subr.bf16.mxu0 0
    %681 = vmatpush1.bf16.msra.mxu0 0
    %682 = vmatprep.subr.bf16.mxu0 0
    %683 = vmatpush1.bf16.msra.mxu0 0
    %684 = vmatprep.subr.bf16.mxu0 0
    %685 = vmatpush1.bf16.msra.mxu0 0
    %686 = vmatprep.subr.bf16.mxu0 0
    %687 = vmatpush1.bf16.msra.mxu0 0
    %688 = vmatprep.mubr.bf16.mxu0 0
    %689 = vmatmul.mubr.bf16.gmra.mrb[0].mxu0 %v257
    %v690 = vpop.f32.mrb[0].mxu0
    %v691 = vadd.f32 %v578, %v690
    %v692 = vpop.f32.mrb[0].mxu0
    %v693 = vadd.f32 %v580, %v692
    %v694 = vpop.f32.mrb[0].mxu0
    %v695 = vadd.f32 %v582, %v694
    %v696 = vpop.f32.mrb[0].mxu0
    %v697 = vadd.f32 %v584, %v696
    %698 = vmatprep.mubr.bf16.mxu0 0
    %699 = vmatmul.mubr.bf16.gmra.mrb[0].mxu0 %v260
    %v700 = vpop.f32.mrb[0].mxu0
    %v701 = vadd.f32 %v588, %v700
    %v702 = vpop.f32.mrb[0].mxu0
    %v703 = vadd.f32 %v590, %v702
    %v704 = vpop.f32.mrb[0].mxu0
    %v705 = vadd.f32 %v592, %v704
    %v706 = vpop.f32.mrb[0].mxu0
    %v707 = vadd.f32 %v594, %v706
    %708 = vmatprep.mubr.bf16.mxu0 0
    %709 = vmatmul.mubr.bf16.gmra.mrb[0].mxu0 %v263
    %v710 = vpop.f32.mrb[0].mxu0
    %v711 = vadd.f32 %v598, %v710
    %v712 = vpop.f32.mrb[0].mxu0
    %v713 = vadd.f32 %v600, %v712
    %v714 = vpop.f32.mrb[0].mxu0
    %v715 = vadd.f32 %v602, %v714
    %v716 = vpop.f32.mrb[0].mxu0
    %v717 = vadd.f32 %v604, %v716
    %718 = vmatprep.mubr.bf16.mxu0 0
    %719 = vmatmul.mubr.bf16.gmra.mrb[0].mxu0 %v266
    %v720 = vpop.f32.mrb[0].mxu0
    %v721 = vadd.f32 %v608, %v720
    %v722 = vpop.f32.mrb[0].mxu0
    %v723 = vadd.f32 %v610, %v722
    %v724 = vpop.f32.mrb[0].mxu0
    %v725 = vadd.f32 %v612, %v724
    %v726 = vpop.f32.mrb[0].mxu0
    %v727 = vadd.f32 %v614, %v726
    %728 = vmatprep.mubr.bf16.mxu0 0
    %729 = vmatmul.mubr.bf16.gmra.mrb[0].mxu0 %v269
    %v730 = vpop.f32.mrb[0].mxu0
    %v731 = vadd.f32 %v618, %v730
    %v732 = vpop.f32.mrb[0].mxu0
    %v733 = vadd.f32 %v620, %v732
    %v734 = vpop.f32.mrb[0].mxu0
    %v735 = vadd.f32 %v622, %v734
    %v736 = vpop.f32.mrb[0].mxu0
    %v737 = vadd.f32 %v624, %v736
    %738 = vmatprep.mubr.bf16.mxu0 0
    %739 = vmatmul.mubr.bf16.gmra.mrb[0].mxu0 %v272
    %v740 = vpop.f32.mrb[0].mxu0
    %v741 = vadd.f32 %v628, %v740
    %v742 = vpop.f32.mrb[0].mxu0
    %v743 = vadd.f32 %v630, %v742
    %v744 = vpop.f32.mrb[0].mxu0
    %v745 = vadd.f32 %v632, %v744
    %v746 = vpop.f32.mrb[0].mxu0
    %v747 = vadd.f32 %v634, %v746
    %748 = vmatprep.mubr.bf16.mxu0 0
    %749 = vmatmul.mubr.bf16.gmra.mrb[0].mxu0 %v275
    %v750 = vpop.f32.mrb[0].mxu0
    %v751 = vadd.f32 %v638, %v750
    %v752 = vpop.f32.mrb[0].mxu0
    %v753 = vadd.f32 %v640, %v752
    %v754 = vpop.f32.mrb[0].mxu0
    %v755 = vadd.f32 %v642, %v754
    %v756 = vpop.f32.mrb[0].mxu0
    %v757 = vadd.f32 %v644, %v756
    %758 = vmatprep.mubr.bf16.mxu0 0
    %759 = vmatmul.mubr.bf16.gmra.mrb[0].mxu0 %v278
    %v760 = vpop.f32.mrb[0].mxu0
    %v761 = vadd.f32 %v648, %v760
    %v762 = vpop.f32.mrb[0].mxu0
    %v763 = vadd.f32 %v650, %v762
    %v764 = vpop.f32.mrb[0].mxu0
    %v765 = vadd.f32 %v652, %v764
    %v766 = vpop.f32.mrb[0].mxu0
    %v767 = vadd.f32 %v654, %v766
    %768 = vdwg.mxu0
    %v769 = vmax.f32 %v691, 0.0
    %v770 = vmax.f32 %v693, 0.0
    %v771 = vmax.f32 %v695, 0.0
    %v772 = vmax.f32 %v697, 0.0
    %v773 = vmax.f32 %v701, 0.0
    %v774 = vmax.f32 %v703, 0.0
    %v775 = vmax.f32 %v705, 0.0
    %v776 = vmax.f32 %v707, 0.0
    %v777 = vmax.f32 %v711, 0.0
    %v778 = vmax.f32 %v713, 0.0
    %v779 = vmax.f32 %v715, 0.0
    %v780 = vmax.f32 %v717, 0.0
    %v781 = vmax.f32 %v721, 0.0
    %v782 = vmax.f32 %v723, 0.0
    %v783 = vmax.f32 %v725, 0.0
    %v784 = vmax.f32 %v727, 0.0
    %v785 = vmax.f32 %v731, 0.0
    %v786 = vmax.f32 %v733, 0.0
    %v787 = vmax.f32 %v735, 0.0
    %v788 = vmax.f32 %v737, 0.0
    %v789 = vmax.f32 %v741, 0.0
    %v790 = vmax.f32 %v743, 0.0
    %v791 = vmax.f32 %v745, 0.0
    %v792 = vmax.f32 %v747, 0.0
    %v793 = vmax.f32 %v751, 0.0
    %v794 = vmax.f32 %v753, 0.0
    %v795 = vmax.f32 %v755, 0.0
    %v796 = vmax.f32 %v757, 0.0
    %v797 = vmax.f32 %v761, 0.0
    %v798 = vmax.f32 %v763, 0.0
    %v799 = vmax.f32 %v765, 0.0
    %v800 = vmax.f32 %v767, 0.0
    %v801 = vpack.c.bf16 %v771, %v769
    %v802 = vpack.c.bf16 %v772, %v770
    %v803 = vpack.c.bf16 %v775, %v773
    %v804 = vpack.c.bf16 %v776, %v774
    %v805 = vpack.c.bf16 %v779, %v777
    %v806 = vpack.c.bf16 %v780, %v778
    %v807 = vpack.c.bf16 %v783, %v781
    %v808 = vpack.c.bf16 %v784, %v782
    %v809 = vpack.c.bf16 %v787, %v785
    %v810 = vpack.c.bf16 %v788, %v786
    %v811 = vpack.c.bf16 %v791, %v789
    %v812 = vpack.c.bf16 %v792, %v790
    %v813 = vpack.c.bf16 %v795, %v793
    %v814 = vpack.c.bf16 %v796, %v794
    %v815 = vpack.c.bf16 %v799, %v797
    %v816 = vpack.c.bf16 %v800, %v798
    %v817 = vld [vmem:[#allocation7] sm:$0xff]
    %v818 = vld [vmem:[#allocation7 + $0x8] sm:$0xff]
    %v819 = vld [vmem:[#allocation7 + $0x10] sm:$0xff]
    %v820 = vld [vmem:[#allocation7 + $0x18] sm:$0xff]
    %v821 = vld [vmem:[#allocation7 + $0x20] sm:$0xff]
    %v822 = vld [vmem:[#allocation7 + $0x28] sm:$0xff]
    %v823 = vld [vmem:[#allocation7 + $0x30] sm:$0xff]
    %v824 = vld [vmem:[#allocation7 + $0x38] sm:$0xff]
    %v825 = vld [vmem:[#allocation7 + $0x40] sm:$0xff]
    %v826 = vld [vmem:[#allocation7 + $0x48] sm:$0xff]
    %v827 = vld [vmem:[#allocation7 + $0x50] sm:$0xff]
    %v828 = vld [vmem:[#allocation7 + $0x58] sm:$0xff]
    %v829 = vld [vmem:[#allocation7 + $0x60] sm:$0xff]
    %v830 = vld [vmem:[#allocation7 + $0x68] sm:$0xff]
    %v831 = vld [vmem:[#allocation7 + $0x70] sm:$0xff]
    %v832 = vld [vmem:[#allocation7 + $0x78] sm:$0xff]
    %v833 = vld [vmem:[#allocation7 + $0x80] sm:$0xff]
    %v834 = vld [vmem:[#allocation7 + $0x88] sm:$0xff]
    %v835 = vld [vmem:[#allocation7 + $0x90] sm:$0xff]
    %v836 = vld [vmem:[#allocation7 + $0x98] sm:$0xff]
    %v837 = vld [vmem:[#allocation7 + $0xa0] sm:$0xff]
    %v838 = vld [vmem:[#allocation7 + $0xa8] sm:$0xff]
    %v839 = vld [vmem:[#allocation7 + $0xb0] sm:$0xff]
    %v840 = vld [vmem:[#allocation7 + $0xb8] sm:$0xff]
    %v841 = vld [vmem:[#allocation7 + $0xc0] sm:$0xff]
    %v842 = vld [vmem:[#allocation7 + $0xc8] sm:$0xff]
    %v843 = vld [vmem:[#allocation7 + $0xd0] sm:$0xff]
    %v844 = vld [vmem:[#allocation7 + $0xd8] sm:$0xff]
    %v845 = vld [vmem:[#allocation7 + $0xe0] sm:$0xff]
    %v846 = vld [vmem:[#allocation7 + $0xe8] sm:$0xff]
    %v847 = vld [vmem:[#allocation7 + $0xf0] sm:$0xff]
    %v848 = vld [vmem:[#allocation7 + $0xf8] sm:$0xff]
    %v849 = vld [vmem:[%s4] sm:$0x3]
    %v851 = vlaneseq
    %v852 = vshrl.u32 %v851, 7
    %v853 = vsub.s32 0, %v852
    %v854 = vrot.slane %v849, %v853
    %v855 = vlaneseq
    %v856 = vshrl.u32 %v855, 7
    %v857 = vsub.s32 1, %v856
    %v858 = vrot.slane %v849, %v857
    %v893 = vunpack.c.l.b16 %v817
    %v894 = vunpack.c.h.b16 %v817
    %v895 = vunpack.c.l.b16 %v818
    %v896 = vunpack.c.h.b16 %v818
    %v897 = vunpack.c.l.b16 %v819
    %v898 = vunpack.c.h.b16 %v819
    %v899 = vunpack.c.l.b16 %v820
    %v900 = vunpack.c.h.b16 %v820
    %v901 = vunpack.c.l.b16 %v821
    %v902 = vunpack.c.h.b16 %v821
    %v903 = vunpack.c.l.b16 %v822
    %v904 = vunpack.c.h.b16 %v822
    %v905 = vunpack.c.l.b16 %v823
    %v906 = vunpack.c.h.b16 %v823
    %v907 = vunpack.c.l.b16 %v824
    %v908 = vunpack.c.h.b16 %v824
    %v909 = vunpack.c.l.b16 %v825
    %v910 = vunpack.c.h.b16 %v825
    %v911 = vunpack.c.l.b16 %v826
    %v912 = vunpack.c.h.b16 %v826
    %v913 = vunpack.c.l.b16 %v827
    %v914 = vunpack.c.h.b16 %v827
    %v915 = vunpack.c.l.b16 %v828
    %v916 = vunpack.c.h.b16 %v828
    %v917 = vunpack.c.l.b16 %v829
    %v918 = vunpack.c.h.b16 %v829
    %v919 = vunpack.c.l.b16 %v830
    %v920 = vunpack.c.h.b16 %v830
    %v921 = vunpack.c.l.b16 %v831
    %v922 = vunpack.c.h.b16 %v831
    %v923 = vunpack.c.l.b16 %v832
    %v924 = vunpack.c.h.b16 %v832
    %v925 = vunpack.c.l.b16 %v833
    %v926 = vunpack.c.h.b16 %v833
    %v927 = vunpack.c.l.b16 %v834
    %v928 = vunpack.c.h.b16 %v834
    %v929 = vunpack.c.l.b16 %v835
    %v930 = vunpack.c.h.b16 %v835
    %v931 = vunpack.c.l.b16 %v836
    %v932 = vunpack.c.h.b16 %v836
    %v933 = vunpack.c.l.b16 %v837
    %v934 = vunpack.c.h.b16 %v837
    %v935 = vunpack.c.l.b16 %v838
    %v936 = vunpack.c.h.b16 %v838
    %v937 = vunpack.c.l.b16 %v839
    %v938 = vunpack.c.h.b16 %v839
    %v939 = vunpack.c.l.b16 %v840
    %v940 = vunpack.c.h.b16 %v840
    %v941 = vunpack.c.l.b16 %v841
    %v942 = vunpack.c.h.b16 %v841
    %v943 = vunpack.c.l.b16 %v842
    %v944 = vunpack.c.h.b16 %v842
    %v945 = vunpack.c.l.b16 %v843
    %v946 = vunpack.c.h.b16 %v843
    %v947 = vunpack.c.l.b16 %v844
    %v948 = vunpack.c.h.b16 %v844
    %v949 = vunpack.c.l.b16 %v845
    %v950 = vunpack.c.h.b16 %v845
    %v951 = vunpack.c.l.b16 %v846
    %v952 = vunpack.c.h.b16 %v846
    %v953 = vunpack.c.l.b16 %v847
    %v954 = vunpack.c.h.b16 %v847
    %v955 = vunpack.c.l.b16 %v848
    %v956 = vunpack.c.h.b16 %v848
    %v957 = vpack.c.b16 %v895, %v893
    %v958 = vpack.c.b16 %v896, %v894
    %v959 = vpack.c.b16 %v899, %v897
    %v960 = vpack.c.b16 %v900, %v898
    %v961 = vpack.c.b16 %v903, %v901
    %v962 = vpack.c.b16 %v904, %v902
    %v963 = vpack.c.b16 %v907, %v905
    %v964 = vpack.c.b16 %v908, %v906
    %v965 = vpack.c.b16 %v911, %v909
    %v966 = vpack.c.b16 %v912, %v910
    %v967 = vpack.c.b16 %v915, %v913
    %v968 = vpack.c.b16 %v916, %v914
    %v969 = vpack.c.b16 %v919, %v917
    %v970 = vpack.c.b16 %v920, %v918
    %v971 = vpack.c.b16 %v923, %v921
    %v972 = vpack.c.b16 %v924, %v922
    %v973 = vpack.c.b16 %v927, %v925
    %v974 = vpack.c.b16 %v928, %v926
    %v975 = vpack.c.b16 %v931, %v929
    %v976 = vpack.c.b16 %v932, %v930
    %v977 = vpack.c.b16 %v935, %v933
    %v978 = vpack.c.b16 %v936, %v934
    %v979 = vpack.c.b16 %v939, %v937
    %v980 = vpack.c.b16 %v940, %v938
    %v981 = vpack.c.b16 %v943, %v941
    %v982 = vpack.c.b16 %v944, %v942
    %v983 = vpack.c.b16 %v947, %v945
    %v984 = vpack.c.b16 %v948, %v946
    %v985 = vpack.c.b16 %v951, %v949
    %v986 = vpack.c.b16 %v952, %v950
    %v987 = vpack.c.b16 %v955, %v953
    %v988 = vpack.c.b16 %v956, %v954
    %1021 = vmatprep.subr.bf16.mxu0 %v958
    %1022 = vmatpush1.bf16.msra.mxu0 %v957
    %1023 = vmatprep.subr.bf16.mxu0 %v960
    %1024 = vmatpush1.bf16.msra.mxu0 %v959
    %1025 = vmatprep.subr.bf16.mxu0 %v962
    %1026 = vmatpush1.bf16.msra.mxu0 %v961
    %1027 = vmatprep.subr.bf16.mxu0 %v964
    %1028 = vmatpush1.bf16.msra.mxu0 %v963
    %1029 = vmatprep.subr.bf16.mxu0 %v966
    %1030 = vmatpush1.bf16.msra.mxu0 %v965
    %1031 = vmatprep.subr.bf16.mxu0 %v968
    %1032 = vmatpush1.bf16.msra.mxu0 %v967
    %1033 = vmatprep.subr.bf16.mxu0 %v970
    %1034 = vmatpush1.bf16.msra.mxu0 %v969
    %1035 = vmatprep.subr.bf16.mxu0 %v972
    %1036 = vmatpush1.bf16.msra.mxu0 %v971
    %1037 = vmatprep.subr.bf16.mxu0 %v974
    %1038 = vmatpush1.bf16.msra.mxu0 %v973
    %1039 = vmatprep.subr.bf16.mxu0 %v976
    %1040 = vmatpush1.bf16.msra.mxu0 %v975
    %1041 = vmatprep.subr.bf16.mxu0 %v978
    %1042 = vmatpush1.bf16.msra.mxu0 %v977
    %1043 = vmatprep.subr.bf16.mxu0 %v980
    %1044 = vmatpush1.bf16.msra.mxu0 %v979
    %1045 = vmatprep.subr.bf16.mxu0 %v982
    %1046 = vmatpush1.bf16.msra.mxu0 %v981
    %1047 = vmatprep.subr.bf16.mxu0 %v984
    %1048 = vmatpush1.bf16.msra.mxu0 %v983
    %1049 = vmatprep.subr.bf16.mxu0 %v986
    %1050 = vmatpush1.bf16.msra.mxu0 %v985
    %1051 = vmatprep.subr.bf16.mxu0 %v988
    %1052 = vmatpush1.bf16.msra.mxu0 %v987
    %1053 = vmatprep.mubr.bf16.mxu0 %v802
    %1054 = vmatmul.mubr.bf16.gmra.mrb[0].mxu0 %v801
    %v1055 = vpop.f32.mrb[0].mxu0
    %v1056 = vadd.f32 %v854, %v1055
    %v1057 = vpop.f32.mrb[0].mxu0
    %v1058 = vadd.f32 %v858, %v1057
    %v1059 = vpop.f32.mrb[0].mxu0
    %v1060 = vadd.f32 %v854, %v1059
    %v1061 = vpop.f32.mrb[0].mxu0
    %v1062 = vadd.f32 %v858, %v1061
    %1063 = vmatprep.mubr.bf16.mxu0 %v804
    %1064 = vmatmul.mubr.bf16.gmra.mrb[0].mxu0 %v803
    %v1065 = vpop.f32.mrb[0].mxu0
    %v1066 = vadd.f32 %v854, %v1065
    %v1067 = vpop.f32.mrb[0].mxu0
    %v1068 = vadd.f32 %v858, %v1067
    %v1069 = vpop.f32.mrb[0].mxu0
    %v1070 = vadd.f32 %v854, %v1069
    %v1071 = vpop.f32.mrb[0].mxu0
    %v1072 = vadd.f32 %v858, %v1071
    %1073 = vmatprep.mubr.bf16.mxu0 %v806
    %1074 = vmatmul.mubr.bf16.gmra.mrb[0].mxu0 %v805
    %v1075 = vpop.f32.mrb[0].mxu0
    %v1076 = vadd.f32 %v854, %v1075
    %v1077 = vpop.f32.mrb[0].mxu0
    %v1078 = vadd.f32 %v858, %v1077
    %v1079 = vpop.f32.mrb[0].mxu0
    %v1080 = vadd.f32 %v854, %v1079
    %v1081 = vpop.f32.mrb[0].mxu0
    %v1082 = vadd.f32 %v858, %v1081
    %1083 = vmatprep.mubr.bf16.mxu0 %v808
    %1084 = vmatmul.mubr.bf16.gmra.mrb[0].mxu0 %v807
    %v1085 = vpop.f32.mrb[0].mxu0
    %v1086 = vadd.f32 %v854, %v1085
    %v1087 = vpop.f32.mrb[0].mxu0
    %v1088 = vadd.f32 %v858, %v1087
    %v1089 = vpop.f32.mrb[0].mxu0
    %v1090 = vadd.f32 %v854, %v1089
    %v1091 = vpop.f32.mrb[0].mxu0
    %v1092 = vadd.f32 %v858, %v1091
    %1093 = vmatprep.mubr.bf16.mxu0 %v810
    %1094 = vmatmul.mubr.bf16.gmra.mrb[0].mxu0 %v809
    %v1095 = vpop.f32.mrb[0].mxu0
    %v1096 = vadd.f32 %v854, %v1095
    %v1097 = vpop.f32.mrb[0].mxu0
    %v1098 = vadd.f32 %v858, %v1097
    %v1099 = vpop.f32.mrb[0].mxu0
    %v1100 = vadd.f32 %v854, %v1099
    %v1101 = vpop.f32.mrb[0].mxu0
    %v1102 = vadd.f32 %v858, %v1101
    %1103 = vmatprep.mubr.bf16.mxu0 %v812
    %1104 = vmatmul.mubr.bf16.gmra.mrb[0].mxu0 %v811
    %v1105 = vpop.f32.mrb[0].mxu0
    %v1106 = vadd.f32 %v854, %v1105
    %v1107 = vpop.f32.mrb[0].mxu0
    %v1108 = vadd.f32 %v858, %v1107
    %v1109 = vpop.f32.mrb[0].mxu0
    %v1110 = vadd.f32 %v854, %v1109
    %v1111 = vpop.f32.mrb[0].mxu0
    %v1112 = vadd.f32 %v858, %v1111
    %1113 = vmatprep.mubr.bf16.mxu0 %v814
    %1114 = vmatmul.mubr.bf16.gmra.mrb[0].mxu0 %v813
    %v1115 = vpop.f32.mrb[0].mxu0
    %v1116 = vadd.f32 %v854, %v1115
    %v1117 = vpop.f32.mrb[0].mxu0
    %v1118 = vadd.f32 %v858, %v1117
    %v1119 = vpop.f32.mrb[0].mxu0
    %v1120 = vadd.f32 %v854, %v1119
    %v1121 = vpop.f32.mrb[0].mxu0
    %v1122 = vadd.f32 %v858, %v1121
    %1123 = vmatprep.mubr.bf16.mxu0 %v816
    %1124 = vmatmul.mubr.bf16.gmra.mrb[0].mxu0 %v815
    %v1125 = vpop.f32.mrb[0].mxu0
    %v1126 = vadd.f32 %v854, %v1125
    %v1127 = vpop.f32.mrb[0].mxu0
    %v1128 = vadd.f32 %v858, %v1127
    %v1129 = vpop.f32.mrb[0].mxu0
    %v1130 = vadd.f32 %v854, %v1129
    %v1131 = vpop.f32.mrb[0].mxu0
    %v1132 = vadd.f32 %v858, %v1131
    %1133 = vdwg.mxu0
    %v1134 = vmax.f32 %v1056, 0.0
    %v1135 = vmax.f32 %v1058, 0.0
    %v1136 = vmax.f32 %v1060, 0.0
    %v1137 = vmax.f32 %v1062, 0.0
    %v1138 = vmax.f32 %v1066, 0.0
    %v1139 = vmax.f32 %v1068, 0.0
    %v1140 = vmax.f32 %v1070, 0.0
    %v1141 = vmax.f32 %v1072, 0.0
    %v1142 = vmax.f32 %v1076, 0.0
    %v1143 = vmax.f32 %v1078, 0.0
    %v1144 = vmax.f32 %v1080, 0.0
    %v1145 = vmax.f32 %v1082, 0.0
    %v1146 = vmax.f32 %v1086, 0.0
    %v1147 = vmax.f32 %v1088, 0.0
    %v1148 = vmax.f32 %v1090, 0.0
    %v1149 = vmax.f32 %v1092, 0.0
    %v1150 = vmax.f32 %v1096, 0.0
    %v1151 = vmax.f32 %v1098, 0.0
    %v1152 = vmax.f32 %v1100, 0.0
    %v1153 = vmax.f32 %v1102, 0.0
    %v1154 = vmax.f32 %v1106, 0.0
    %v1155 = vmax.f32 %v1108, 0.0
    %v1156 = vmax.f32 %v1110, 0.0
    %v1157 = vmax.f32 %v1112, 0.0
    %v1158 = vmax.f32 %v1116, 0.0
    %v1159 = vmax.f32 %v1118, 0.0
    %v1160 = vmax.f32 %v1120, 0.0
    %v1161 = vmax.f32 %v1122, 0.0
    %v1162 = vmax.f32 %v1126, 0.0
    %v1163 = vmax.f32 %v1128, 0.0
    %v1164 = vmax.f32 %v1130, 0.0
    %v1165 = vmax.f32 %v1132, 0.0
    %v1166 = vpack.c.bf16 %v1136, %v1134
    %v1167 = vpack.c.bf16 %v1137, %v1135
    %v1168 = vpack.c.bf16 %v1140, %v1138
    %v1169 = vpack.c.bf16 %v1141, %v1139
    %v1170 = vpack.c.bf16 %v1144, %v1142
    %v1171 = vpack.c.bf16 %v1145, %v1143
    %v1172 = vpack.c.bf16 %v1148, %v1146
    %v1173 = vpack.c.bf16 %v1149, %v1147
    %v1174 = vpack.c.bf16 %v1152, %v1150
    %v1175 = vpack.c.bf16 %v1153, %v1151
    %v1176 = vpack.c.bf16 %v1156, %v1154
    %v1177 = vpack.c.bf16 %v1157, %v1155
    %v1178 = vpack.c.bf16 %v1160, %v1158
    %v1179 = vpack.c.bf16 %v1161, %v1159
    %v1180 = vpack.c.bf16 %v1164, %v1162
    %v1181 = vpack.c.bf16 %v1165, %v1163
    %v1182 = vld [vmem:[#allocation8] sm:$0xf]
    %v1183 = vld [vmem:[#allocation8 + $0x4] sm:$0xf]
    %v1184 = vld [vmem:[#allocation8 + $0x8] sm:$0xf]
    %v1185 = vld [vmem:[#allocation8 + $0xc] sm:$0xf]
    %v1186 = vld [vmem:[#allocation8 + $0x10] sm:$0xf]
    %v1187 = vld [vmem:[#allocation8 + $0x14] sm:$0xf]
    %v1188 = vld [vmem:[#allocation8 + $0x18] sm:$0xf]
    %v1189 = vld [vmem:[#allocation8 + $0x1c] sm:$0xf]
    %v1190 = vld [vmem:[#allocation8 + $0x20] sm:$0xf]
    %v1191 = vld [vmem:[#allocation8 + $0x24] sm:$0xf]
    %v1192 = vld [vmem:[#allocation8 + $0x28] sm:$0xf]
    %v1193 = vld [vmem:[#allocation8 + $0x2c] sm:$0xf]
    %v1194 = vld [vmem:[#allocation8 + $0x30] sm:$0xf]
    %v1195 = vld [vmem:[#allocation8 + $0x34] sm:$0xf]
    %v1196 = vld [vmem:[#allocation8 + $0x38] sm:$0xf]
    %v1197 = vld [vmem:[#allocation8 + $0x3c] sm:$0xf]
    %v1198 = vld [vmem:[#allocation8 + $0x40] sm:$0xf]
    %v1199 = vld [vmem:[#allocation8 + $0x44] sm:$0xf]
    %v1200 = vld [vmem:[#allocation8 + $0x48] sm:$0xf]
    %v1201 = vld [vmem:[#allocation8 + $0x4c] sm:$0xf]
    %v1202 = vld [vmem:[#allocation8 + $0x50] sm:$0xf]
    %v1203 = vld [vmem:[#allocation8 + $0x54] sm:$0xf]
    %v1204 = vld [vmem:[#allocation8 + $0x58] sm:$0xf]
    %v1205 = vld [vmem:[#allocation8 + $0x5c] sm:$0xf]
    %v1206 = vld [vmem:[#allocation8 + $0x60] sm:$0xf]
    %v1207 = vld [vmem:[#allocation8 + $0x64] sm:$0xf]
    %v1208 = vld [vmem:[#allocation8 + $0x68] sm:$0xf]
    %v1209 = vld [vmem:[#allocation8 + $0x6c] sm:$0xf]
    %v1210 = vld [vmem:[#allocation8 + $0x70] sm:$0xf]
    %v1211 = vld [vmem:[#allocation8 + $0x74] sm:$0xf]
    %v1212 = vld [vmem:[#allocation8 + $0x78] sm:$0xf]
    %v1213 = vld [vmem:[#allocation8 + $0x7c] sm:$0xf]
    %v1214 = vld [vmem:[%s6] sm:$0x1]
    %v1216 = vlaneseq
    %v1217 = vshrl.u32 %v1216, 7
    %v1218 = vsub.s32 0, %v1217
    %v1219 = vrot.slane %v1214, %v1218
    %v1253 = vunpack.c.l.b16 %v1182
    %v1254 = vunpack.c.l.b16 %v1183
    %v1255 = vunpack.c.l.b16 %v1184
    %v1256 = vunpack.c.l.b16 %v1185
    %v1257 = vunpack.c.l.b16 %v1186
    %v1258 = vunpack.c.l.b16 %v1187
    %v1259 = vunpack.c.l.b16 %v1188
    %v1260 = vunpack.c.l.b16 %v1189
    %v1261 = vunpack.c.l.b16 %v1190
    %v1262 = vunpack.c.l.b16 %v1191
    %v1263 = vunpack.c.l.b16 %v1192
    %v1264 = vunpack.c.l.b16 %v1193
    %v1265 = vunpack.c.l.b16 %v1194
    %v1266 = vunpack.c.l.b16 %v1195
    %v1267 = vunpack.c.l.b16 %v1196
    %v1268 = vunpack.c.l.b16 %v1197
    %v1269 = vunpack.c.l.b16 %v1198
    %v1270 = vunpack.c.l.b16 %v1199
    %v1271 = vunpack.c.l.b16 %v1200
    %v1272 = vunpack.c.l.b16 %v1201
    %v1273 = vunpack.c.l.b16 %v1202
    %v1274 = vunpack.c.l.b16 %v1203
    %v1275 = vunpack.c.l.b16 %v1204
    %v1276 = vunpack.c.l.b16 %v1205
    %v1277 = vunpack.c.l.b16 %v1206
    %v1278 = vunpack.c.l.b16 %v1207
    %v1279 = vunpack.c.l.b16 %v1208
    %v1280 = vunpack.c.l.b16 %v1209
    %v1281 = vunpack.c.l.b16 %v1210
    %v1282 = vunpack.c.l.b16 %v1211
    %v1283 = vunpack.c.l.b16 %v1212
    %v1284 = vunpack.c.l.b16 %v1213
    %v1285 = vpack.c.b16 %v1254, %v1253
    %v1286 = vpack.c.b16 %v1256, %v1255
    %v1287 = vpack.c.b16 %v1258, %v1257
    %v1288 = vpack.c.b16 %v1260, %v1259
    %v1289 = vpack.c.b16 %v1262, %v1261
    %v1290 = vpack.c.b16 %v1264, %v1263
    %v1291 = vpack.c.b16 %v1266, %v1265
    %v1292 = vpack.c.b16 %v1268, %v1267
    %v1293 = vpack.c.b16 %v1270, %v1269
    %v1294 = vpack.c.b16 %v1272, %v1271
    %v1295 = vpack.c.b16 %v1274, %v1273
    %v1296 = vpack.c.b16 %v1276, %v1275
    %v1297 = vpack.c.b16 %v1278, %v1277
    %v1298 = vpack.c.b16 %v1280, %v1279
    %v1299 = vpack.c.b16 %v1282, %v1281
    %v1300 = vpack.c.b16 %v1284, %v1283
    %1317 = vmatprep.subr.bf16.mxu0 0
    %1318 = vmatpush1.bf16.msra.mxu0 %v1285
    %1319 = vmatprep.subr.bf16.mxu0 0
    %1320 = vmatpush1.bf16.msra.mxu0 %v1286
    %1321 = vmatprep.subr.bf16.mxu0 0
    %1322 = vmatpush1.bf16.msra.mxu0 %v1287
    %1323 = vmatprep.subr.bf16.mxu0 0
    %1324 = vmatpush1.bf16.msra.mxu0 %v1288
    %1325 = vmatprep.subr.bf16.mxu0 0
    %1326 = vmatpush1.bf16.msra.mxu0 %v1289
    %1327 = vmatprep.subr.bf16.mxu0 0
    %1328 = vmatpush1.bf16.msra.mxu0 %v1290
    %1329 = vmatprep.subr.bf16.mxu0 0
    %1330 = vmatpush1.bf16.msra.mxu0 %v1291
    %1331 = vmatprep.subr.bf16.mxu0 0
    %1332 = vmatpush1.bf16.msra.mxu0 %v1292
    %1333 = vmatprep.subr.bf16.mxu0 0
    %1334 = vmatpush1.bf16.msra.mxu0 %v1293
    %1335 = vmatprep.subr.bf16.mxu0 0
    %1336 = vmatpush1.bf16.msra.mxu0 %v1294
    %1337 = vmatprep.subr.bf16.mxu0 0
    %1338 = vmatpush1.bf16.msra.mxu0 %v1295
    %1339 = vmatprep.subr.bf16.mxu0 0
    %1340 = vmatpush1.bf16.msra.mxu0 %v1296
    %1341 = vmatprep.subr.bf16.mxu0 0
    %1342 = vmatpush1.bf16.msra.mxu0 %v1297
    %1343 = vmatprep.subr.bf16.mxu0 0
    %1344 = vmatpush1.bf16.msra.mxu0 %v1298
    %1345 = vmatprep.subr.bf16.mxu0 0
    %1346 = vmatpush1.bf16.msra.mxu0 %v1299
    %1347 = vmatprep.subr.bf16.mxu0 0
    %1348 = vmatpush1.bf16.msra.mxu0 %v1300
    %1349 = vmatprep.mubr.bf16.mxu0 %v1167
    %1350 = vmatmul.mubr.bf16.gmra.mrb[0].mxu0 %v1166
    %v1351 = vpop.f32.mrb[0].mxu0
    %v1352 = vadd.f32 %v1219, %v1351
    %v1353 = vpop.f32.mrb[0].mxu0
    %v1354 = vpop.f32.mrb[0].mxu0
    %v1355 = vadd.f32 %v1219, %v1354
    %v1356 = vpop.f32.mrb[0].mxu0
    %1357 = vmatprep.mubr.bf16.mxu0 %v1169
    %1358 = vmatmul.mubr.bf16.gmra.mrb[0].mxu0 %v1168
    %v1359 = vpop.f32.mrb[0].mxu0
    %v1360 = vadd.f32 %v1219, %v1359
    %v1361 = vpop.f32.mrb[0].mxu0
    %v1362 = vpop.f32.mrb[0].mxu0
    %v1363 = vadd.f32 %v1219, %v1362
    %v1364 = vpop.f32.mrb[0].mxu0
    %1365 = vmatprep.mubr.bf16.mxu0 %v1171
    %1366 = vmatmul.mubr.bf16.gmra.mrb[0].mxu0 %v1170
    %v1367 = vpop.f32.mrb[0].mxu0
    %v1368 = vadd.f32 %v1219, %v1367
    %v1369 = vpop.f32.mrb[0].mxu0
    %v1370 = vpop.f32.mrb[0].mxu0
    %v1371 = vadd.f32 %v1219, %v1370
    %v1372 = vpop.f32.mrb[0].mxu0
    %1373 = vmatprep.mubr.bf16.mxu0 %v1173
    %1374 = vmatmul.mubr.bf16.gmra.mrb[0].mxu0 %v1172
    %v1375 = vpop.f32.mrb[0].mxu0
    %v1376 = vadd.f32 %v1219, %v1375
    %v1377 = vpop.f32.mrb[0].mxu0
    %v1378 = vpop.f32.mrb[0].mxu0
    %v1379 = vadd.f32 %v1219, %v1378
    %v1380 = vpop.f32.mrb[0].mxu0
    %1381 = vmatprep.mubr.bf16.mxu0 %v1175
    %1382 = vmatmul.mubr.bf16.gmra.mrb[0].mxu0 %v1174
    %v1383 = vpop.f32.mrb[0].mxu0
    %v1384 = vadd.f32 %v1219, %v1383
    %v1385 = vpop.f32.mrb[0].mxu0
    %v1386 = vpop.f32.mrb[0].mxu0
    %v1387 = vadd.f32 %v1219, %v1386
    %v1388 = vpop.f32.mrb[0].mxu0
    %1389 = vmatprep.mubr.bf16.mxu0 %v1177
    %1390 = vmatmul.mubr.bf16.gmra.mrb[0].mxu0 %v1176
    %v1391 = vpop.f32.mrb[0].mxu0
    %v1392 = vadd.f32 %v1219, %v1391
    %v1393 = vpop.f32.mrb[0].mxu0
    %v1394 = vpop.f32.mrb[0].mxu0
    %v1395 = vadd.f32 %v1219, %v1394
    %v1396 = vpop.f32.mrb[0].mxu0
    %1397 = vmatprep.mubr.bf16.mxu0 %v1179
    %1398 = vmatmul.mubr.bf16.gmra.mrb[0].mxu0 %v1178
    %v1399 = vpop.f32.mrb[0].mxu0
    %v1400 = vadd.f32 %v1219, %v1399
    %v1401 = vpop.f32.mrb[0].mxu0
    %v1402 = vpop.f32.mrb[0].mxu0
    %v1403 = vadd.f32 %v1219, %v1402
    %v1404 = vpop.f32.mrb[0].mxu0
    %1405 = vmatprep.mubr.bf16.mxu0 %v1181
    %1406 = vmatmul.mubr.bf16.gmra.mrb[0].mxu0 %v1180
    %v1407 = vpop.f32.mrb[0].mxu0
    %v1408 = vadd.f32 %v1219, %v1407
    %v1409 = vpop.f32.mrb[0].mxu0
    %v1410 = vpop.f32.mrb[0].mxu0
    %v1411 = vadd.f32 %v1219, %v1410
    %v1412 = vpop.f32.mrb[0].mxu0
    %1413 = vdwg.mxu0
    %v1414 = vxor.u32 %v1352, 2147483648
    %v1415 = vxor.u32 %v1355, 2147483648
    %v1416 = vxor.u32 %v1360, 2147483648
    %v1417 = vxor.u32 %v1363, 2147483648
    %v1418 = vxor.u32 %v1368, 2147483648
    %v1419 = vxor.u32 %v1371, 2147483648
    %v1420 = vxor.u32 %v1376, 2147483648
    %v1421 = vxor.u32 %v1379, 2147483648
    %v1422 = vxor.u32 %v1384, 2147483648
    %v1423 = vxor.u32 %v1387, 2147483648
    %v1424 = vxor.u32 %v1392, 2147483648
    %v1425 = vxor.u32 %v1395, 2147483648
    %v1426 = vxor.u32 %v1400, 2147483648
    %v1427 = vxor.u32 %v1403, 2147483648
    %v1428 = vxor.u32 %v1408, 2147483648
    %v1429 = vxor.u32 %v1411, 2147483648
    %v1430 = vmul.f32 %v1414, 1.442695
    %v1431 = vpow.pop %v1430
    %v1432 = vmul.f32 %v1415, 1.442695
    %v1433 = vpow.pop %v1432
    %v1434 = vmul.f32 %v1416, 1.442695
    %v1435 = vpow.pop %v1434
    %v1436 = vmul.f32 %v1417, 1.442695
    %v1437 = vpow.pop %v1436
    %v1438 = vmul.f32 %v1418, 1.442695
    %v1439 = vpow.pop %v1438
    %v1440 = vmul.f32 %v1419, 1.442695
    %v1441 = vpow.pop %v1440
    %v1442 = vmul.f32 %v1420, 1.442695
    %v1443 = vpow.pop %v1442
    %v1444 = vmul.f32 %v1421, 1.442695
    %v1445 = vpow.pop %v1444
    %v1446 = vmul.f32 %v1422, 1.442695
    %v1447 = vpow.pop %v1446
    %v1448 = vmul.f32 %v1423, 1.442695
    %v1449 = vpow.pop %v1448
    %v1450 = vmul.f32 %v1424, 1.442695
    %v1451 = vpow.pop %v1450
    %v1452 = vmul.f32 %v1425, 1.442695
    %v1453 = vpow.pop %v1452
    %v1454 = vmul.f32 %v1426, 1.442695
    %v1455 = vpow.pop %v1454
    %v1456 = vmul.f32 %v1427, 1.442695
    %v1457 = vpow.pop %v1456
    %v1458 = vmul.f32 %v1428, 1.442695
    %v1459 = vpow.pop %v1458
    %v1460 = vmul.f32 %v1429, 1.442695
    %v1461 = vpow.pop %v1460
    %v1462 = vadd.f32 %v1431, 1.0
    %v1463 = vadd.f32 %v1433, 1.0
    %v1464 = vadd.f32 %v1435, 1.0
    %v1465 = vadd.f32 %v1437, 1.0
    %v1466 = vadd.f32 %v1439, 1.0
    %v1467 = vadd.f32 %v1441, 1.0
    %v1468 = vadd.f32 %v1443, 1.0
    %v1469 = vadd.f32 %v1445, 1.0
    %v1470 = vadd.f32 %v1447, 1.0
    %v1471 = vadd.f32 %v1449, 1.0
    %v1472 = vadd.f32 %v1451, 1.0
    %v1473 = vadd.f32 %v1453, 1.0
    %v1474 = vadd.f32 %v1455, 1.0
    %v1475 = vadd.f32 %v1457, 1.0
    %v1476 = vadd.f32 %v1459, 1.0
    %v1477 = vadd.f32 %v1461, 1.0
    %v1478 = vrcp.pop %v1462
    %v1479 = vmul.f32 1.0, %v1478
    %v1480 = vrcp.pop %v1463
    %v1481 = vmul.f32 1.0, %v1480
    %v1482 = vrcp.pop %v1464
    %v1483 = vmul.f32 1.0, %v1482
    %v1484 = vrcp.pop %v1465
    %v1485 = vmul.f32 1.0, %v1484
    %v1486 = vrcp.pop %v1466
    %v1487 = vmul.f32 1.0, %v1486
    %v1488 = vrcp.pop %v1467
    %v1489 = vmul.f32 1.0, %v1488
    %v1490 = vrcp.pop %v1468
    %v1491 = vmul.f32 1.0, %v1490
    %v1492 = vrcp.pop %v1469
    %v1493 = vmul.f32 1.0, %v1492
    %v1494 = vrcp.pop %v1470
    %v1495 = vmul.f32 1.0, %v1494
    %v1496 = vrcp.pop %v1471
    %v1497 = vmul.f32 1.0, %v1496
    %v1498 = vrcp.pop %v1472
    %v1499 = vmul.f32 1.0, %v1498
    %v1500 = vrcp.pop %v1473
    %v1501 = vmul.f32 1.0, %v1500
    %v1502 = vrcp.pop %v1474
    %v1503 = vmul.f32 1.0, %v1502
    %v1504 = vrcp.pop %v1475
    %v1505 = vmul.f32 1.0, %v1504
    %v1506 = vrcp.pop %v1476
    %v1507 = vmul.f32 1.0, %v1506
    %v1508 = vrcp.pop %v1477
    %v1509 = vmul.f32 1.0, %v1508
    %1510 = vst [vmem:[#allocation10] sm:$0xff] %v1479
    %1511 = vst [vmem:[#allocation10 + $0x8] sm:$0xff] %v1481
    %1512 = vst [vmem:[#allocation10 + $0x10] sm:$0xff] %v1483
    %1513 = vst [vmem:[#allocation10 + $0x18] sm:$0xff] %v1485
    %1514 = vst [vmem:[#allocation10 + $0x20] sm:$0xff] %v1487
    %1515 = vst [vmem:[#allocation10 + $0x28] sm:$0xff] %v1489
    %1516 = vst [vmem:[#allocation10 + $0x30] sm:$0xff] %v1491
    %1517 = vst [vmem:[#allocation10 + $0x38] sm:$0xff] %v1493
    %1518 = vst [vmem:[#allocation10 + $0x40] sm:$0xff] %v1495
    %1519 = vst [vmem:[#allocation10 + $0x48] sm:$0xff] %v1497
    %1520 = vst [vmem:[#allocation10 + $0x50] sm:$0xff] %v1499
    %1521 = vst [vmem:[#allocation10 + $0x58] sm:$0xff] %v1501
    %1522 = vst [vmem:[#allocation10 + $0x60] sm:$0xff] %v1503
    %1523 = vst [vmem:[#allocation10 + $0x68] sm:$0xff] %v1505
    %1524 = vst [vmem:[#allocation10 + $0x70] sm:$0xff] %v1507
    %1525 = vst [vmem:[#allocation10 + $0x78] sm:$0xff] %v1509
    // Predicated region
    $region46: #{tpu_custom_call.1} parent=1 // pred_check
      _
    $region47: #{tpu_custom_call.1} parent=1 // pred_check_branch
      %1527 = sbr.rel (0) target = $region49
    $region48: #{tpu_custom_call.1} parent=1 // pred_region
      %s1529 = ssub.s32 2048, 2048
      %1530 = vsyncadd [#allocation4], %s1529
      %s1531 = sshll.u32 [#allocation10], 4
      %s1532 = int_to_ptr.vmem [resolvable:$true] %s1531
      %1537 = dma.vmem_to_hbm [thread:$0]  %s1532, 2048, %s7, [#allocation4], 128, 128, 8
    $region49: #{tpu_custom_call.1} parent=1 // pred_fallthru
      _
    // Predicated region
    $region50: #{tpu_custom_call.1} parent=1 // pred_check
      _
    $region51: #{tpu_custom_call.1} parent=1 // pred_check_branch
      %1539 = sbr.rel (0) target = $region53
    $region52: #{tpu_custom_call.1} parent=1 // pred_region
      %1540 = dma.done [#allocation4], 2048
    $region53: #{tpu_custom_call.1} parent=1 // pred_fallthru
      _
    %1541 = vsyncpa [#allocation3], 1
    %1542 = vsyncpa [#allocation6], 1
    %1543 = vsyncpa [#allocation9], 1
    %1544 = vsyncpa [#allocation4], 1

</llo_original>
